<compile_context>
chip_gen: v5e
topology: v5e:2x2
jax: 0.10.0
libtpu: 0.0.40
codegen_flags: <defaults>
</compile_context>

<pallas_src>
import functools

import jax
import jax.numpy as jnp
from jax.experimental import pallas as pl
from jax.experimental.pallas import tpu as pltpu


def _bce_kernel(t_ref, p_ref, o_ref, acc_ref, *, inv_n, tile_n):
    n = pl.program_id(1)

    @pl.when(n == 0)
    def _():
        acc_ref[...] = jnp.zeros_like(acc_ref)

    t = t_ref[...].astype(jnp.float32)
    p = p_ref[...].astype(jnp.float32)
    # Elementwise BCE term (same sign convention as the PyTorch module).
    # log1p(-p) == log(1 - p) mathematically; better numerics for p ~ 1.
    val = t * jnp.log(p) + (1.0 - t) * jnp.log1p(-p)

    if tile_n % 8 == 0:
        # Fold the batch tile 8 rows at a time: sublane-aligned slices -> plain
        # full-vreg VPU adds, no per-step cross-sublane (XLU) reduce.
        part = val[0:8, :]
        for i in range(8, tile_n, 8):
            part = part + val[i:i + 8, :]
        acc_ref[...] += part
    else:
        # Rare fallback (full-batch tile whose N is not a multiple of 8).
        acc_ref[0:1, :] = acc_ref[0:1, :] + jnp.sum(val, axis=0, keepdims=True)

    @pl.when(n == pl.num_programs(1) - 1)
    def _():
        # Single cross-sublane reduce + scale by the precomputed 1/N.
        o_ref[...] = jnp.sum(acc_ref[...], axis=0, keepdims=True) * inv_n


def _pick_tile(dim, preferred, quantum):
    """Largest multiple of `quantum` <= preferred that divides `dim`, else full dim."""
    if dim <= preferred:
        return dim  # full-extent block is always legal
    t = (preferred // quantum) * quantum
    while t >= quantum:
        if dim % t == 0:
            return t
        t -= quantum
    return dim


def loss_bce_forward(target, prediction, *, tile_n=None, tile_d=None):
    """Computes (t*log(p) + (1-t)*log(1-p)).mean(axis=0) with a Pallas TPU kernel."""
    assert target.shape == prediction.shape and target.ndim == 2
    N, D = target.shape

    itemsizes = (jnp.dtype(target.dtype).itemsize, jnp.dtype(prediction.dtype).itemsize)
    # Minimum legal sublane tile for the narrowest input dtype: 8 f32 / 16 bf16 / 32 i8.
    quantum_n = max(8, 32 // min(itemsizes))

    # ---- feature (lane) tile: big and lane-dense ----------------------------
    if tile_d is None:
        tile_d = _pick_tile(D, 1024, 128)
        # v7x megacore: prefer >= 2 blocks along the "parallel" D axis so both
        # TensorCores get work, but never shrink a DMA'd row chunk below 512 lanes.
        if D // tile_d < 2 and D % 128 == 0 and D >= 2 * 512:
            half = _pick_tile(D, D // 2, 128)
            if half >= 512 and D % half == 0 and D // half >= 2:
                tile_d = half

    # ---- batch (sublane) tile: bounded by ~16 MiB double-buffered inputs ----
    vmem_budget = 16 * 1024 * 1024
    per_row_bytes = 2 * tile_d * sum(itemsizes)  # 2 pipeline buffers per input
    if tile_n is None:
        max_rows = max(quantum_n, vmem_budget // per_row_bytes)
        tile_n = _pick_tile(N, min(1024, max_rows), quantum_n)

    assert D % tile_d == 0 and N % tile_n == 0, (N, D, tile_n, tile_d)

    # VMEM guard for odd-shape fallbacks / user-supplied oversized tiles.
    footprint = tile_n * per_row_bytes + (2 * 1 + 8) * tile_d * 4
    compiler_kwargs = dict(dimension_semantics=("parallel", "arbitrary"))
    if footprint > vmem_budget:
        compiler_kwargs["vmem_limit_bytes"] = int(footprint + (4 << 20))

    kernel = functools.partial(_bce_kernel, inv_n=float(1.0 / N), tile_n=tile_n)

    cost = pl.CostEstimate(
        flops=5 * N * D,
        transcendentals=2 * N * D,
        bytes_accessed=N * D * sum(itemsizes) + 4 * D,
    )

    out = pl.pallas_call(
        kernel,
        out_shape=jax.ShapeDtypeStruct((1, D), jnp.float32),
        grid=(D // tile_d, N // tile_n),  # D leading (parallel), N last (reduction)
        in_specs=[
            pl.BlockSpec((tile_n, tile_d), lambda j, n: (n, j)),
            pl.BlockSpec((tile_n, tile_d), lambda j, n: (n, j)),
        ],
        out_specs=pl.BlockSpec((1, tile_d), lambda j, n: (0, j)),
        scratch_shapes=[pltpu.VMEM((8, tile_d), jnp.float32)],
        compiler_params=pltpu.CompilerParams(**compiler_kwargs),
        cost_estimate=cost,
    )(target, prediction)
    return out[0]  # shape (D,), matching torch .mean(dim=0)


if __name__ == "__main__":
    key = jax.random.PRNGKey(0)
    k_t, k_p = jax.random.split(key)

    # Small shapes consistent with the module's 2-D (batch, features) inputs.
    N, D = 16, 256

    # target in {0, 1}, prediction strictly in (0, 1)
    target = jax.random.bernoulli(k_t, p=0.5, shape=(N, D)).astype(jnp.float32)
    prediction = jax.nn.sigmoid(jax.random.normal(k_p, (N, D), dtype=jnp.float32))

    # plain-JAX reference (mirrors the PyTorch module expression)
    ref = jnp.mean(
        target * jnp.log(prediction) + (1.0 - target) * jnp.log(1.0 - prediction),
        axis=0,
    )

    # Explicit small tiles: exercises both grid axes (2 feature x 2 batch blocks).
    r1 = loss_bce_forward(target, prediction, tile_n=8, tile_d=128)
    jax.block_until_ready(r1)
    assert r1.shape == (D,)
    assert jnp.allclose(r1, ref, atol=1e-5, rtol=1e-5)

    # Default (large-tile) path collapses correctly at small shapes.
    r2 = loss_bce_forward(target, prediction)
    jax.block_until_ready(r2)
    assert jnp.allclose(r2, ref, atol=1e-5, rtol=1e-5)

    # bf16 inputs (halves HBM bytes; math is still f32 inside the kernel).
    tb = target.astype(jnp.bfloat16)
    pb = prediction.astype(jnp.bfloat16)
    tb32, pb32 = tb.astype(jnp.float32), pb.astype(jnp.float32)
    ref_bf = jnp.mean(
        tb32 * jnp.log(pb32) + (1.0 - tb32) * jnp.log(1.0 - pb32), axis=0
    )
    r3 = loss_bce_forward(tb, pb)
    jax.block_until_ready(r3)
    assert jnp.allclose(r3, ref_bf, atol=1e-4, rtol=1e-4)

    print("KERNEL_OK")
</pallas_src>

<mosaic_0001>
module attributes {stable_mosaic.version = 11 : i64} {
  func.func @_bce_kernel(%arg0: i32, %arg1: i32, %arg2: memref<8x128xf32, #tpu.memory_space<vmem>>, %arg3: memref<8x128xf32, #tpu.memory_space<vmem>>, %arg4: memref<1x128xf32, #tpu.memory_space<vmem>>, %arg5: memref<8x128xf32, #tpu.memory_space<vmem>>) attributes {dimension_semantics = [#tpu.dimension_semantics<parallel>, #tpu.dimension_semantics<arbitrary>], iteration_bounds = array<i64: 2, 2>, scalar_prefetch = 0 : i64, scratch_operands = 1 : i64, tpu.core_type = #tpu.core_type<tc>, window_params = [{transform_indices = @transform_0, window_bounds = array<i64: 8, 128>}, {transform_indices = @transform_1, window_bounds = array<i64: 8, 128>}, {transform_indices = @transform_2, window_bounds = array<i64: 1, 128>}]} {
    %c0_i32 = arith.constant 0 : i32
    %0 = arith.cmpi eq, %arg1, %c0_i32 : i32
    %1 = arith.extui %0 : i1 to i32
    %c0_i32_0 = arith.constant 0 : i32
    %2 = arith.cmpi ne, %1, %c0_i32_0 : i32
    scf.if %2 {
      %cst_10 = arith.constant 0.000000e+00 : f32
      %20 = vector.broadcast %cst_10 : f32 to vector<8x128xf32>
      %c0_11 = arith.constant 0 : index
      %c0_12 = arith.constant 0 : index
      %21 = vector.load %arg5[%c0_11, %c0_12] : memref<8x128xf32, #tpu.memory_space<vmem>>, vector<8x128xf32>
      tpu.vector_store %arg5[%c0_11, %c0_12], %20 {strides = array<i32>} : memref<8x128xf32, #tpu.memory_space<vmem>>, vector<8x128xf32>,
    } else {
    }
    %c0 = arith.constant 0 : index
    %c0_1 = arith.constant 0 : index
    %3 = vector.load %arg2[%c0, %c0_1] : memref<8x128xf32, #tpu.memory_space<vmem>>, vector<8x128xf32>
    %c0_2 = arith.constant 0 : index
    %c0_3 = arith.constant 0 : index
    %4 = vector.load %arg3[%c0_2, %c0_3] : memref<8x128xf32, #tpu.memory_space<vmem>>, vector<8x128xf32>
    %5 = math.log %4 : vector<8x128xf32>
    %6 = arith.mulf %3, %5 : vector<8x128xf32>
    %cst = arith.constant 1.000000e+00 : f32
    %7 = vector.broadcast %cst : f32 to vector<8x128xf32>
    %8 = arith.subf %7, %3 : vector<8x128xf32>
    %cst_4 = arith.constant 0.000000e+00 : f32
    %9 = vector.broadcast %cst_4 : f32 to vector<8x128xf32>
    %10 = arith.subf %9, %4 : vector<8x128xf32>
    %11 = math.log1p %10 : vector<8x128xf32>
    %12 = arith.mulf %8, %11 : vector<8x128xf32>
    %13 = arith.addf %6, %12 : vector<8x128xf32>
    %c0_5 = arith.constant 0 : index
    %c0_6 = arith.constant 0 : index
    %14 = vector.load %arg5[%c0_5, %c0_6] : memref<8x128xf32, #tpu.memory_space<vmem>>, vector<8x128xf32>
    %15 = arith.addf %14, %13 : vector<8x128xf32>
    %c0_7 = arith.constant 0 : index
    %c0_8 = arith.constant 0 : index
    %16 = vector.load %arg5[%c0_7, %c0_8] : memref<8x128xf32, #tpu.memory_space<vmem>>, vector<8x128xf32>
    tpu.vector_store %arg5[%c0_7, %c0_8], %15 {strides = array<i32>} : memref<8x128xf32, #tpu.memory_space<vmem>>, vector<8x128xf32>,
    %c1_i32 = arith.constant 1 : i32
    %17 = arith.cmpi eq, %arg1, %c1_i32 : i32
    %18 = arith.extui %17 : i1 to i32
    %c0_i32_9 = arith.constant 0 : i32
    %19 = arith.cmpi ne, %18, %c0_i32_9 : i32
    scf.if %19 {
      %c0_10 = arith.constant 0 : index
      %c0_11 = arith.constant 0 : index
      %20 = vector.load %arg5[%c0_10, %c0_11] : memref<8x128xf32, #tpu.memory_space<vmem>>, vector<8x128xf32>
      %cst_12 = arith.constant dense<0.000000e+00> : vector<128xf32>
      %21 = vector.multi_reduction <add>, %20, %cst_12 [0] : vector<8x128xf32> to vector<128xf32>
      %22 = vector.shape_cast %21 : vector<128xf32> to vector<1x128xf32>
      %cst_13 = arith.constant 6.250000e-02 : f32
      %23 = vector.broadcast %cst_13 : f32 to vector<1x128xf32>
      %24 = arith.mulf %22, %23 : vector<1x128xf32>
      %c0_14 = arith.constant 0 : index
      %c0_15 = arith.constant 0 : index
      %25 = vector.load %arg4[%c0_14, %c0_15] : memref<1x128xf32, #tpu.memory_space<vmem>>, vector<1x128xf32>
      tpu.vector_store %arg4[%c0_14, %c0_15], %24 {strides = array<i32>} : memref<1x128xf32, #tpu.memory_space<vmem>>, vector<1x128xf32>,
    } else {
    }
    return
  }
  func.func @transform_0(%arg0: i32, %arg1: i32) -> (i32, i32) {
    %c0_i32 = arith.constant 0 : i32
    return %arg1, %arg0 : i32, i32
  }
  func.func @transform_1(%arg0: i32, %arg1: i32) -> (i32, i32) {
    %c0_i32 = arith.constant 0 : i32
    return %arg1, %arg0 : i32, i32
  }
  func.func @transform_2(%arg0: i32, %arg1: i32) -> (i32, i32) {
    %c0_i32 = arith.constant 0 : i32
    %c0_i32_0 = arith.constant 0 : i32
    return %c0_i32, %arg0 : i32, i32
  }
}

</mosaic_0001>

<llo_original>
// kernel: tpu_custom_call.1
$region0: #{tpu_custom_call.1}
  #allocation0 [shape = 'u32[]', space=smem, size = 0x4, offset = 0x4, fixed_abs, tag = 'smem constant byte address 0x4 - core index']
  #allocation1 [shape = 'u32[72,128]{1,0:T(1,128)}', space=vmem, size = 0x9000, scoped, tag = 'internal scratch']
  #allocation2 [shape = 'f32[8,128]{1,0:T(8,128)}', space=vmem, size = 0x1000, scoped, tag = 'scratch operand']
  %s0 = inlined_call_operand.hbm [shape: f32[16,256], index: 0, kind: input, shape index: {}]
  %s1 = inlined_call_operand.hbm [shape: f32[16,256], index: 1, kind: input, shape index: {}]
  %s2 = inlined_call_operand.hbm [shape: f32[1,256], index: 2, kind: output, shape index: {}]
  %s3 = sld [smem:[#allocation0]]
  $region57: #{tpu_custom_call.1} parent=0
    _
  %s5 = ssub.s32 1, %s3
  %s6 = scalar_select 0, %s5, %s3
  $region1: #{tpu_custom_call.1} parent=0
    #allocation3 [shape = 'u8[8192]{0}', space=vmem, size = 0x2000, scoped, tag = 'input window, operand 0']
    #allocation4 [shape = 's32[2]{0}', space=sflag, size = 0x8, scoped, tag = 'scoped memory for tpu_custom_call.1']
    #allocation5 [shape = 's32[2]{0}', space=sflag, size = 0x8, scoped, tag = 'scoped memory for tpu_custom_call.1']
    #allocation6 [shape = 'u8[8192]{0}', space=vmem, size = 0x2000, scoped, tag = 'input window, operand 1']
    #allocation7 [shape = 's32[2]{0}', space=sflag, size = 0x8, scoped, tag = 'scoped memory for tpu_custom_call.1']
    #allocation8 [shape = 'u8[1024]{0}', space=vmem, size = 0x400, scoped, tag = 'output window, operand 0']
    %7 = vsyncpa [#allocation4], 0
    %s8 = scalar_lea.sflag [#allocation4], 1
    %9 = vsyncpa %s8, 0
    %10 = vsyncpa [#allocation7], 0
    %s11 = scalar_lea.sflag [#allocation7], 1
    %12 = vsyncpa %s11, 0
    %13 = vsyncpa [#allocation5], 0
    %s14 = scalar_lea.sflag [#allocation5], 1
    %15 = vsyncpa %s14, 0
    loop: start=0, step=1, limit=6
    $region2: #{tpu_custom_call.1} parent=1 // loop_pre_header
      _
    $region3: #{tpu_custom_call.1} parent=1 // loop_header
      %s17 = sphi 0, %s21
      %p18 = scmp.ge.s32.totalorder %s17, 6
      %s24 = sphi 0, %s36
      %s25 = sphi 0, %s32
      %s26 = sphi 0, %s24
      %s27 = sphi 0, %s25
      %s28 = sphi 0, %s26
      %s29 = sphi 0, %s27
      %s41 = sphi 0, %s43
      %s44 = sphi 0, %s41
      %s45 = sphi 0, %s44
      %s61 = sphi 0, %s45
      %s69 = sphi 0, %s71
      %s72 = sphi 0, %s69
      %s73 = sphi 0, %s72
      %s89 = sphi 0, %s73
      %s95 = sphi 0, %s97
      %s98 = sphi 0, %s95
      %s99 = sphi 0, %s98
      %s115 = sphi 0, %s99
    $region4: #{tpu_custom_call.1} parent=1 // loop_header_branch
      %20 = sbr.rel (%p18) target = $region8
    $region5: #{tpu_custom_call.1} parent=1 // loop_body
      %s22 = ssub.s32 %s17, 1
      %s23 = ssub.s32 %s17, 2
      %s30 = sadd.s32 1, %s25
      %p31 = scmp.ge.s32.totalorder %s30, 2
      %s32 = scalar_select %p31, 0, %s30
      %s33 = sadd.s32 1, %s24
      %s34 = scalar_select %p31, %s33, %s24
      %p35 = scmp.ge.s32.totalorder %s34, 2
      %s36 = scalar_select %p35, 0, %s34
      %s37 = ssub.s32 %s25, %s32
      %s38 = ssub.s32 %s24, %s36
      %s39 = sor.u32 %s37, %s38
      %p40 = scmp.eq.s32.totalorder %s39, 0
      %s42 = sadd.s32 %s41, 1
      %s43 = scalar_select %p40, %s41, %s42
      %p46 = pneg %p40
      %p47 = scmp.eq.s32.totalorder %s17, 3
      %p48 = por %p46, %p47
      %p49 = scmp.ne.s32.totalorder %s41, %s44
      %p50 = scmp.eq.s32.totalorder %s17, 0
      %p51 = por %p49, %p50
      %p52 = scmp.ne.s32.totalorder %s41, %s44
      %p53 = scmp.eq.s32.totalorder %s22, 3
      %p54 = por %p52, %p53
      %p55 = scmp.ne.s32.totalorder %s44, %s45
      %p56 = scmp.eq.s32.totalorder %s22, 0
      %p57 = por %p55, %p56
      %p58 = scmp.ne.s32.totalorder %s44, %s45
      %p59 = scmp.eq.s32.totalorder %s23, 3
      %p60 = por %p58, %p59
      %p62 = scmp.ne.s32.totalorder %s45, %s61
      %p63 = scmp.eq.s32.totalorder %s23, 0
      %p64 = por %p62, %p63
      %s65 = ssub.s32 %s25, %s32
      %s66 = ssub.s32 %s24, %s36
      %s67 = sor.u32 %s65, %s66
      %p68 = scmp.eq.s32.totalorder %s67, 0
      %s70 = sadd.s32 %s69, 1
      %s71 = scalar_select %p68, %s69, %s70
      %p74 = pneg %p68
      %p75 = scmp.eq.s32.totalorder %s17, 3
      %p76 = por %p74, %p75
      %p77 = scmp.ne.s32.totalorder %s69, %s72
      %p78 = scmp.eq.s32.totalorder %s17, 0
      %p79 = por %p77, %p78
      %p80 = scmp.ne.s32.totalorder %s69, %s72
      %p81 = scmp.eq.s32.totalorder %s22, 3
      %p82 = por %p80, %p81
      %p83 = scmp.ne.s32.totalorder %s72, %s73
      %p84 = scmp.eq.s32.totalorder %s22, 0
      %p85 = por %p83, %p84
      %p86 = scmp.ne.s32.totalorder %s72, %s73
      %p87 = scmp.eq.s32.totalorder %s23, 3
      %p88 = por %p86, %p87
      %p90 = scmp.ne.s32.totalorder %s73, %s89
      %p91 = scmp.eq.s32.totalorder %s23, 0
      %p92 = por %p90, %p91
      %s93 = ssub.s32 %s24, %s36
      %p94 = scmp.eq.s32.totalorder %s93, 0
      %s96 = sadd.s32 %s95, 1
      %s97 = scalar_select %p94, %s95, %s96
      %p100 = pneg %p94
      %p101 = scmp.eq.s32.totalorder %s17, 3
      %p102 = por %p100, %p101
      %p103 = scmp.ne.s32.totalorder %s95, %s98
      %p104 = scmp.eq.s32.totalorder %s17, 0
      %p105 = por %p103, %p104
      %p106 = scmp.ne.s32.totalorder %s95, %s98
      %p107 = scmp.eq.s32.totalorder %s22, 3
      %p108 = por %p106, %p107
      %p109 = scmp.ne.s32.totalorder %s98, %s99
      %p110 = scmp.eq.s32.totalorder %s22, 0
      %p111 = por %p109, %p110
      %p112 = scmp.ne.s32.totalorder %s98, %s99
      %p113 = scmp.eq.s32.totalorder %s23, 3
      %p114 = por %p112, %p113
      %p116 = scmp.ne.s32.totalorder %s99, %s115
      %p117 = scmp.eq.s32.totalorder %s23, 0
      %p118 = por %p116, %p117
      %p119 = scmp.le.s32.totalorder 1, %s17
      %p120 = scmp.lt.s32.totalorder %s17, 5
      %p121 = pnand %p119, %p120
      %p122 = pneg %p121
      // Predicated region
      $region9: #{tpu_custom_call.1} parent=5 // pred_check
        _
      $region10: #{tpu_custom_call.1} parent=5 // pred_check_branch
        %124 = sbr.rel (%p121) target = $region12
      $region11: #{tpu_custom_call.1} parent=5 // pred_region
        %s125 = ssub.s32 %s17, 1
      $region12: #{tpu_custom_call.1} parent=5 // pred_fallthru
        _
      %p126 = scmp.lt.s32.totalorder %s17, 4
      // Predicated region
      $region13: #{tpu_custom_call.1} parent=5 // pred_check
        %p127 = pneg %p126
      $region14: #{tpu_custom_call.1} parent=5 // pred_check_branch
        %129 = sbr.rel (%p127) target = $region16
      $region15: #{tpu_custom_call.1} parent=5 // pred_region
        // Predicated region
        $region17: #{tpu_custom_call.1} parent=15 // pred_check
          %p130 = pneg %p51
        $region18: #{tpu_custom_call.1} parent=15 // pred_check_branch
          %132 = sbr.rel (%p130) target = $region20
        $region19: #{tpu_custom_call.1} parent=15 // pred_region
          %s133 = sand.u32 %s41, 1
          %s134 = scalar_lea.sflag [#allocation4], %s133
          %s135 = sand.u32 %s41, 1
          %s136 = smul.addr %s135, 8
          %s137 = scalar_lea.vmem [#allocation3], %s136
          %139 = vsyncadd %s134, 0
          %s140 = smul.addr %s25, 2
          %s141 = sadd.s32 %s24, %s140
          %s142 = smul.addr %s141, 8
          %s143 = scalar_lea.hbm %s0, %s142
          %s145 = sshll.u32 %s143, 4
          %s146 = int_to_ptr.hbm [resolvable:$true] %s145
          %s147 = sshll.u32 %s137, 4
          %s148 = int_to_ptr.vmem [resolvable:$true] %s147
          %150 = dma.hbm_to_vmem [thread:$0]  %s146, 128, %s148, %s134
        $region20: #{tpu_custom_call.1} parent=15 // pred_fallthru
          _
        // Predicated region
        $region21: #{tpu_custom_call.1} parent=15 // pred_check
          %p151 = pneg %p79
        $region22: #{tpu_custom_call.1} parent=15 // pred_check_branch
          %153 = sbr.rel (%p151) target = $region24
        $region23: #{tpu_custom_call.1} parent=15 // pred_region
          %s154 = sand.u32 %s69, 1
          %s155 = scalar_lea.sflag [#allocation7], %s154
          %s156 = sand.u32 %s69, 1
          %s157 = smul.addr %s156, 8
          %s158 = scalar_lea.vmem [#allocation6], %s157
          %160 = vsyncadd %s155, 0
          %s161 = smul.addr %s25, 2
          %s162 = sadd.s32 %s24, %s161
          %s163 = smul.addr %s162, 8
          %s164 = scalar_lea.hbm %s1, %s163
          %s166 = sshll.u32 %s164, 4
          %s167 = int_to_ptr.hbm [resolvable:$true] %s166
          %s168 = sshll.u32 %s158, 4
          %s169 = int_to_ptr.vmem [resolvable:$true] %s168
          %171 = dma.hbm_to_vmem [thread:$0]  %s167, 128, %s169, %s155
        $region24: #{tpu_custom_call.1} parent=15 // pred_fallthru
          _
      $region16: #{tpu_custom_call.1} parent=5 // pred_fallthru
        _
      %p172 = scmp.le.s32.totalorder 1, %s17
      %p173 = scmp.lt.s32.totalorder %s17, 5
      %p174 = pnand %p172, %p173
      %p175 = pneg %p174
      // Predicated region
      $region25: #{tpu_custom_call.1} parent=5 // pred_check
        _
      $region26: #{tpu_custom_call.1} parent=5 // pred_check_branch
        %177 = sbr.rel (%p174) target = $region28
      $region27: #{tpu_custom_call.1} parent=5 // pred_region
        %s178 = ssub.s32 %s17, 1
        %s179 = sand.u32 %s44, 1
        %s180 = scalar_lea.sflag [#allocation4], %s179
        %s181 = sand.u32 %s44, 1
        %s182 = smul.addr %s181, 8
        %s183 = scalar_lea.vmem [#allocation3], %s182
        // Predicated region
        $region29: #{tpu_custom_call.1} parent=27 // pred_check
          %p184 = pneg %p57
        $region30: #{tpu_custom_call.1} parent=27 // pred_check_branch
          %186 = sbr.rel (%p184) target = $region32
        $region31: #{tpu_custom_call.1} parent=27 // pred_region
          %188 = dma.done %s180, 128
        $region32: #{tpu_custom_call.1} parent=27 // pred_fallthru
          _
        %s189 = sand.u32 %s72, 1
        %s190 = scalar_lea.sflag [#allocation7], %s189
        %s191 = sand.u32 %s72, 1
        %s192 = smul.addr %s191, 8
        %s193 = scalar_lea.vmem [#allocation6], %s192
        // Predicated region
        $region33: #{tpu_custom_call.1} parent=27 // pred_check
          %p194 = pneg %p85
        $region34: #{tpu_custom_call.1} parent=27 // pred_check_branch
          %196 = sbr.rel (%p194) target = $region36
        $region35: #{tpu_custom_call.1} parent=27 // pred_region
          %198 = dma.done %s190, 128
        $region36: #{tpu_custom_call.1} parent=27 // pred_fallthru
          _
        %s199 = sand.u32 %s44, 1
        %s200 = scalar_lea.sflag [#allocation4], %s199
        %s201 = sand.u32 %s44, 1
        %s202 = smul.addr %s201, 8
        %s203 = scalar_lea.vmem [#allocation3], %s202
        %p204 = pneg %p57
        %p205 = pneg %p54
        %s206 = sand.u32 %s72, 1
        %s207 = scalar_lea.sflag [#allocation7], %s206
        %s208 = sand.u32 %s72, 1
        %s209 = smul.addr %s208, 8
        %s210 = scalar_lea.vmem [#allocation6], %s209
        %p211 = pneg %p85
        %p212 = pneg %p82
        %p213 = pneg %p111
        %p214 = pneg %p108
        %s215 = sand.u32 %s98, 1
        %s216 = scalar_lea.sflag [#allocation5], %s215
        %s217 = sand.u32 %s98, 1
        %s218 = scalar_lea.vmem [#allocation8], %s217
        %p219 = scmp.eq.s32.totalorder %s27, 0
        // Predicated region
        $region37: #{tpu_custom_call.1} parent=27 // pred_check
          %p220 = pneg %p219
        $region38: #{tpu_custom_call.1} parent=27 // pred_check_branch
          %222 = sbr.rel (%p220) target = $region40
        $region39: #{tpu_custom_call.1} parent=27 // pred_region
          %223 = vst [vmem:[#allocation2] sm:$0xff] 0.0
        $region40: #{tpu_custom_call.1} parent=27 // pred_fallthru
          _
        %v224 = vld [vmem:[%s183] sm:$0xff]
        %v225 = vld [vmem:[%s193] sm:$0xff]
        %v226 = vlog2.pop %v225
        %v227 = vmul.f32 %v226, 0.6931472
        %v228 = vmul.f32 %v224, %v227
        %v229 = vsub.f32 1.0, %v224
        %v230 = vsub.f32 0.0, %v225
        %v231 = vadd.f32 %v230, 1.0
        %v232 = vlog2.pop %v231
        %v233 = vmul.f32 %v232, 0.6931472
        %v234 = vmul.f32 -0.5, %v230
        %v235 = vadd.f32 %v234, 1.0
        %v236 = vmul.f32 %v235, %v230
        %v237 = vand.u32 2147483647, %v230
        %vm238 = vcmp.lt.f32.partialorder %v237, 0.0004427343
        %v239 = vsel %vm238, %v236, %v233
        %v240 = vmul.f32 %v229, %v239
        %v241 = vadd.f32 %v228, %v240
        %v242 = vld [vmem:[#allocation2] sm:$0xff]
        %v243 = vadd.f32 %v242, %v241
        %244 = vst [vmem:[#allocation2] sm:$0xff] %v243
        %p245 = scmp.eq.s32.totalorder %s27, 1
        // Predicated region
        $region41: #{tpu_custom_call.1} parent=27 // pred_check
          %p246 = pneg %p245
        $region42: #{tpu_custom_call.1} parent=27 // pred_check_branch
          %248 = sbr.rel (%p246) target = $region44
        $region43: #{tpu_custom_call.1} parent=27 // pred_region
          %v249 = vld [vmem:[#allocation2] sm:$0xff]
          %v250 = vrot.slane %v249, 4
          %v251 = vadd.f32 %v249, %v250
          %v252 = vrot.slane %v251, 2
          %v253 = vadd.f32 %v251, %v252
          %v254 = vrot.slane %v253, 1
          %v255 = vadd.f32 %v253, %v254
          %v256 = vmul.f32 %v255, 0.0625
          %257 = vst [vmem:[%s218] sm:$0x1] %v256
        $region44: #{tpu_custom_call.1} parent=27 // pred_fallthru
          _
        %s258 = sand.u32 %s98, 1
        %s259 = scalar_lea.sflag [#allocation5], %s258
        %s260 = sand.u32 %s98, 1
        %s261 = scalar_lea.vmem [#allocation8], %s260
        // Predicated region
        $region45: #{tpu_custom_call.1} parent=27 // pred_check
          %p262 = pneg %p108
        $region46: #{tpu_custom_call.1} parent=27 // pred_check_branch
          %264 = sbr.rel (%p262) target = $region48
        $region47: #{tpu_custom_call.1} parent=27 // pred_region
          %266 = vsyncadd %s259, 0
          %s267 = scalar_lea.hbm %s2, %s26
          %s269 = sshll.u32 %s261, 4
          %s270 = int_to_ptr.vmem [resolvable:$true] %s269
          %s271 = sshll.u32 %s267, 4
          %s272 = int_to_ptr.hbm [resolvable:$true] %s271
          %274 = dma.vmem_to_hbm [thread:$0]  %s270, 16, %s272, %s259
        $region48: #{tpu_custom_call.1} parent=27 // pred_fallthru
          _
      $region28: #{tpu_custom_call.1} parent=5 // pred_fallthru
        _
      %p275 = scmp.le.s32.totalorder 2, %s17
      // Predicated region
      $region49: #{tpu_custom_call.1} parent=5 // pred_check
        %p276 = pneg %p275
      $region50: #{tpu_custom_call.1} parent=5 // pred_check_branch
        %278 = sbr.rel (%p276) target = $region52
      $region51: #{tpu_custom_call.1} parent=5 // pred_region
        %s279 = ssub.s32 %s17, 2
        // Predicated region
        $region53: #{tpu_custom_call.1} parent=51 // pred_check
          %p280 = pneg %p114
        $region54: #{tpu_custom_call.1} parent=51 // pred_check_branch
          %282 = sbr.rel (%p280) target = $region56
        $region55: #{tpu_custom_call.1} parent=51 // pred_region
          %s283 = sand.u32 %s99, 1
          %s284 = scalar_lea.sflag [#allocation5], %s283
          %s285 = sand.u32 %s99, 1
          %s286 = scalar_lea.vmem [#allocation8], %s285
          %288 = dma.done %s284, 16
        $region56: #{tpu_custom_call.1} parent=51 // pred_fallthru
          _
      $region52: #{tpu_custom_call.1} parent=5 // pred_fallthru
        _
    $region6: #{tpu_custom_call.1} parent=1 // loop_footer
      %s21 = sadd.s32 1, %s17
    $region7: #{tpu_custom_call.1} parent=1 // loop_footer_branch
      %16 = sbr.rel target = $region3
    $region8: #{tpu_custom_call.1} parent=1 // loop_exit
      _
    %289 = vsyncpa [#allocation4], 1
    %s290 = scalar_lea.sflag [#allocation4], 1
    %291 = vsyncpa %s290, 1
    %292 = vsyncpa [#allocation7], 1
    %s293 = scalar_lea.sflag [#allocation7], 1
    %294 = vsyncpa %s293, 1
    %295 = vsyncpa [#allocation5], 1
    %s296 = scalar_lea.sflag [#allocation5], 1
    %297 = vsyncpa %s296, 1

</llo_original>
